<compile_context>
chip_gen: v7x
topology: tpu7x:2x2x1
jax: 0.10.0
libtpu: 0.0.40
codegen_flags: <defaults>
</compile_context>

<pallas_src>
import functools

import jax
import jax.numpy as jnp
from jax import lax
from jax.experimental import pallas as pl
from jax.experimental.pallas import tpu as pltpu


def _round_up(x, m):
    return ((x + m - 1) // m) * m


# --------------------------------------------------------------------------
# Fused kernel (one query-row tile per grid step):
#   per-domain L2 normalize + sigmoid(lambda) gate on context and query,
#   NCC fit (class-sum prototypes from an in-kernel one-hot) and predict
#   (-||q - p||^2 logits), all VMEM-resident.
#
#   gate : (1, D)    f32   sigmoid(lambda)
#   ind  : (DF, D)   f32   0/1 indicator: flat feature column -> domain
#   lbl  : (Nc, 1)   i32   context labels
#   ctx  : (Nc, DF)  bf16/f32  flattened context features (full block)
#   qry  : (Tq, DF)  bf16/f32  flattened query features (row tile)
#   out  : (Tq, Cp)  f32   logits = -||q - prototype_c||^2 (lane-dense, Cp = 128k)
# --------------------------------------------------------------------------
def _sur_fused_kernel(gate_ref, ind_ref, lbl_ref, ctx_ref, qry_ref, out_ref):
    gate = gate_ref[...]                                   # (1, D)  f32
    ind = ind_ref[...]                                     # (DF, D) f32

    def _select(x_ref):
        """Per-domain L2 normalize + sigmoid(lambda) gate, lane-dense (no reshape)."""
        xf = x_ref[...].astype(jnp.float32)                               # (N, DF)
        # per-domain sum of squares via MXU (lane-dense reduction)
        ss = lax.dot_general(xf * xf, ind, (((1,), (0,)), ((), ())),
                             preferred_element_type=jnp.float32)          # (N, D)
        # F.normalize(p=2, eps=1e-12): 1/max(||x||, 1e-12), gate folded in
        g = lax.rsqrt(jnp.maximum(ss, 1e-24)) * gate                      # (N, D)
        # expand per-domain gain back to the flat feature axis (MXU, no transpose)
        gf = lax.dot_general(g, ind, (((1,), (1,)), ((), ())),
                             preferred_element_type=jnp.float32)          # (N, DF)
        return (xf * gf).astype(jnp.bfloat16), g, ss

    # ---- classifier.fit: select context, class-sum prototypes --------------------
    ctx_sel, _, _ = _select(ctx_ref)                                      # (Nc, DF) bf16

    lbl = lbl_ref[...]                                                    # (Nc, 1) i32
    cls_ids = lax.broadcasted_iota(jnp.int32,
                                   (lbl.shape[0], out_ref.shape[1]), 1)   # (Nc, Cp)
    ohf = (lbl == cls_ids).astype(jnp.float32)                            # exact 0/1
    counts = jnp.sum(ohf, axis=0, keepdims=True)                          # (1, Cp)
    inv_cnt = 1.0 / jnp.maximum(counts, 1.0)      # empty class -> zero prototype

    proto_sum = lax.dot_general(ohf.astype(jnp.bfloat16), ctx_sel,
                                (((0,), (0,)), ((), ())),
                                preferred_element_type=jnp.float32)       # (Cp, DF)

    # ||class_sum||^2 as a lane-dense row (ones-row MXU reduce, no transpose)
    ones_row = jnp.ones((1, proto_sum.shape[1]), jnp.float32)
    pn_sum = lax.dot_general(ones_row, proto_sum * proto_sum,
                             (((1,), (1,)), ((), ())),
                             preferred_element_type=jnp.float32)          # (1, Cp)

    # ---- classifier.predict on this query tile ------------------------------------
    qry_sel, gq, ssq = _select(qry_ref)                                   # (Tq, DF) bf16
    # ||q||^2 = sum_d g_d^2 * ss_d  (exact, incl. eps clamp) -- cheap (Tq, D) reduce
    qn = jnp.sum(gq * gq * ssq, axis=-1, keepdims=True)                   # (Tq, 1)

    qp = lax.dot_general(qry_sel, proto_sum.astype(jnp.bfloat16),
                         (((1,), (1,)), ((), ())),
                         preferred_element_type=jnp.float32)              # (Tq, Cp)

    # -||q - p||^2 = 2 q.p - ||q||^2 - ||p||^2, with p = class_sum / count
    out_ref[...] = 2.0 * qp * inv_cnt - qn - pn_sum * (inv_cnt * inv_cnt)


# --------------------------------------------------------------------------
# SurModel forward
# --------------------------------------------------------------------------
@functools.partial(jax.jit, static_argnames=("n_classes",))
def sur_model_forward(lam, context_features, context_labels, target_features, n_classes):
    """
    lam               : (n_domains,)           -- the `_lambda` parameter
    context_features  : (Nc, n_domains, F)     -- any float dtype (bf16 recommended)
    context_labels    : (Nc,) int
    target_features   : (Nq, n_domains, F)
    returns logits    : (Nq, n_classes) f32
    """
    nc, d, f = context_features.shape
    nq = target_features.shape[0]
    df = d * f
    cp = _round_up(n_classes, 128)         # lane-dense logits, sliced off below

    # Query-row tiling: one full block at few-shot sizes, 512-row tiles beyond.
    tq = nq if nq <= 512 else 512
    n_qt = pl.cdiv(nq, tq)

    # sigmoid(lambda) gate and the flat-column -> domain block indicator (tiny, f32).
    gate = jax.nn.sigmoid(lam.astype(jnp.float32)).reshape(1, d)
    ind = jnp.repeat(jnp.eye(d, dtype=jnp.float32), f, axis=0)            # (df, d)
    labels = context_labels.astype(jnp.int32).reshape(nc, 1)

    # Features: reshape only (free); keep the source dtype -- no pad, no f32 copy.
    ctx = context_features.reshape(nc, df)
    qry = target_features.reshape(nq, df)

    # Scoped-VMEM limit sized from the actual footprint (double-buffered blocks plus
    # f32/bf16 temporaries), capped at 64 MiB (v7x physical VMEM).
    fb = context_features.dtype.itemsize
    est = 2 * (nc * df * fb + tq * df * fb + tq * cp * 4 + df * d * 4 + 2 * 8 * 128 * 4)
    est += (nc * df + tq * df + 2 * cp * df) * 6 + (2 << 20)
    vmem_limit = int(min(max(est, 32 << 20), 64 << 20))

    logits_p = pl.pallas_call(
        _sur_fused_kernel,
        out_shape=jax.ShapeDtypeStruct((nq, cp), jnp.float32),
        grid=(n_qt,),
        in_specs=[
            pl.BlockSpec((1, d), lambda i: (0, 0)),       # gate      (pinned)
            pl.BlockSpec((df, d), lambda i: (0, 0)),      # indicator (pinned)
            pl.BlockSpec((nc, 1), lambda i: (0, 0)),      # labels    (pinned)
            pl.BlockSpec((nc, df), lambda i: (0, 0)),     # context   (pinned)
            pl.BlockSpec((tq, df), lambda i: (i, 0)),     # query row tile
        ],
        out_specs=pl.BlockSpec((tq, cp), lambda i: (i, 0)),
        compiler_params=pltpu.CompilerParams(
            dimension_semantics=("parallel",),
            vmem_limit_bytes=vmem_limit),
    )(gate, ind, labels, ctx, qry)

    return logits_p[:, :n_classes]


if __name__ == "__main__":
    key = jax.random.PRNGKey(0)
    n_context, n_query = 10, 6
    n_domains, feat_dim = 8, 32
    n_classes = 5

    k1, k2, k3 = jax.random.split(key, 3)
    # Backbone features typically arrive in bf16; the kernel consumes them as-is
    # (no pad / f32 materialization in the wrapper).
    context_features = jax.random.normal(
        k1, (n_context, n_domains, feat_dim), jnp.float32).astype(jnp.bfloat16)
    target_features = jax.random.normal(
        k2, (n_query, n_domains, feat_dim), jnp.float32).astype(jnp.bfloat16)
    context_labels = jax.random.randint(k3, (n_context,), 0, n_classes, jnp.int32)

    # Deterministic parameter init, matching torch.zeros(n_domains) in __init__.
    lam = jnp.zeros((n_domains,), jnp.float32)

    logits = sur_model_forward(lam, context_features, context_labels,
                               target_features, n_classes)
    jax.block_until_ready(logits)
    assert logits.shape == (n_query, n_classes)
    assert bool(jnp.all(jnp.isfinite(logits)))
    print("KERNEL_OK")
</pallas_src>

<mosaic_0001>
module attributes {stable_mosaic.version = 11 : i64} {
  func.func @_sur_fused_kernel(%arg0: i32, %arg1: memref<1x8xf32, #tpu.memory_space<vmem>>, %arg2: memref<256x8xf32, #tpu.memory_space<vmem>>, %arg3: memref<10x1xi32, #tpu.memory_space<vmem>>, %arg4: memref<10x256xbf16, #tpu.memory_space<vmem>>, %arg5: memref<6x256xbf16, #tpu.memory_space<vmem>>, %arg6: memref<6x128xf32, #tpu.memory_space<vmem>>) attributes {dimension_semantics = [#tpu.dimension_semantics<parallel>], iteration_bounds = array<i64: 1>, scalar_prefetch = 0 : i64, scratch_operands = 0 : i64, tpu.core_type = #tpu.core_type<tc>, window_params = [{pipeline_mode = #tpu.pipeline_mode<synchronous>, transform_indices = @transform_0, window_bounds = array<i64: 1, 8>}, {pipeline_mode = #tpu.pipeline_mode<synchronous>, transform_indices = @transform_1, window_bounds = array<i64: 256, 8>}, {pipeline_mode = #tpu.pipeline_mode<synchronous>, transform_indices = @transform_2, window_bounds = array<i64: 10, 1>}, {pipeline_mode = #tpu.pipeline_mode<synchronous>, transform_indices = @transform_3, window_bounds = array<i64: 10, 256>}, {transform_indices = @transform_4, window_bounds = array<i64: 6, 256>}, {transform_indices = @transform_5, window_bounds = array<i64: 6, 128>}]} {
    %c0 = arith.constant 0 : index
    %c0_0 = arith.constant 0 : index
    %0 = vector.load %arg1[%c0, %c0_0] : memref<1x8xf32, #tpu.memory_space<vmem>>, vector<1x8xf32>
    %c0_1 = arith.constant 0 : index
    %c0_2 = arith.constant 0 : index
    %1 = vector.load %arg2[%c0_1, %c0_2] : memref<256x8xf32, #tpu.memory_space<vmem>>, vector<256x8xf32>
    %c0_3 = arith.constant 0 : index
    %c0_4 = arith.constant 0 : index
    %2 = vector.load %arg4[%c0_3, %c0_4] : memref<10x256xbf16, #tpu.memory_space<vmem>>, vector<10x256xbf16>
    %3 = arith.extf %2 : vector<10x256xbf16> to vector<10x256xf32>
    %4 = arith.mulf %3, %3 : vector<10x256xf32>
    %cst = arith.constant dense<0.000000e+00> : vector<10x8xf32>
    %5 = tpu.matmul %4, %1, %cst {dimension_numbers = #tpu.dot_dimension_numbers<[1], [0], [0], [1], [0, 0, 1, 1], [], []>} : vector<10x256xf32>, vector<256x8xf32>, vector<10x8xf32> -> vector<10x8xf32>
    %cst_5 = arith.constant 1.000000e-24 : f32
    %6 = vector.broadcast %cst_5 : f32 to vector<10x8xf32>
    %7 = arith.maximumf %5, %6 : vector<10x8xf32>
    %8 = math.rsqrt %7 : vector<10x8xf32>
    %9 = vector.broadcast %0 : vector<1x8xf32> to vector<10x8xf32>
    %10 = arith.mulf %8, %9 : vector<10x8xf32>
    %cst_6 = arith.constant dense<0.000000e+00> : vector<10x256xf32>
    %11 = tpu.matmul %10, %1, %cst_6 {dimension_numbers = #tpu.dot_dimension_numbers<[1], [1], [0], [0], [0, 0, 1, 0], [], []>} : vector<10x8xf32>, vector<256x8xf32>, vector<10x256xf32> -> vector<10x256xf32>
    %12 = arith.mulf %3, %11 : vector<10x256xf32>
    %13 = arith.truncf %12 : vector<10x256xf32> to vector<10x256xbf16>
    %c0_7 = arith.constant 0 : index
    %c0_8 = arith.constant 0 : index
    %14 = vector.load %arg3[%c0_7, %c0_8] : memref<10x1xi32, #tpu.memory_space<vmem>>, vector<10x1xi32>
    %15 = tpu.iota {dimensions = array<i32: 1>} : vector<10x128xi32>
    %16 = vector.broadcast %14 : vector<10x1xi32> to vector<10x128xi32>
    %17 = arith.cmpi eq, %16, %15 : vector<10x128xi32>
    %18 = arith.extui %17 : vector<10x128xi1> to vector<10x128xi32>
    %19 = arith.sitofp %18 : vector<10x128xi32> to vector<10x128xf32>
    %cst_9 = arith.constant dense<0.000000e+00> : vector<128xf32>
    %20 = vector.multi_reduction <add>, %19, %cst_9 [0] : vector<10x128xf32> to vector<128xf32>
    %21 = vector.shape_cast %20 : vector<128xf32> to vector<1x128xf32>
    %cst_10 = arith.constant 1.000000e+00 : f32
    %22 = vector.broadcast %cst_10 : f32 to vector<1x128xf32>
    %23 = arith.maximumf %21, %22 : vector<1x128xf32>
    %cst_11 = arith.constant 1.000000e+00 : f32
    %24 = vector.broadcast %cst_11 : f32 to vector<1x128xf32>
    %25 = arith.divf %24, %23 : vector<1x128xf32>
    %26 = arith.truncf %19 : vector<10x128xf32> to vector<10x128xbf16>
    %cst_12 = arith.constant dense<0.000000e+00> : vector<128x256xf32>
    %27 = tpu.matmul %26, %13, %cst_12 {dimension_numbers = #tpu.dot_dimension_numbers<[0], [0], [1], [1], [0, 1, 1, 1], [], []>} : vector<10x128xbf16>, vector<10x256xbf16>, vector<128x256xf32> -> vector<128x256xf32>
    %cst_13 = arith.constant 1.000000e+00 : f32
    %28 = vector.broadcast %cst_13 : f32 to vector<1x256xf32>
    %29 = arith.mulf %27, %27 : vector<128x256xf32>
    %cst_14 = arith.constant dense<0.000000e+00> : vector<1x128xf32>
    %30 = tpu.matmul %28, %29, %cst_14 {dimension_numbers = #tpu.dot_dimension_numbers<[1], [1], [0], [0], [0, 0, 1, 0], [], []>} : vector<1x256xf32>, vector<128x256xf32>, vector<1x128xf32> -> vector<1x128xf32>
    %c0_15 = arith.constant 0 : index
    %c0_16 = arith.constant 0 : index
    %31 = vector.load %arg5[%c0_15, %c0_16] : memref<6x256xbf16, #tpu.memory_space<vmem>>, vector<6x256xbf16>
    %32 = arith.extf %31 : vector<6x256xbf16> to vector<6x256xf32>
    %33 = arith.mulf %32, %32 : vector<6x256xf32>
    %cst_17 = arith.constant dense<0.000000e+00> : vector<6x8xf32>
    %34 = tpu.matmul %33, %1, %cst_17 {dimension_numbers = #tpu.dot_dimension_numbers<[1], [0], [0], [1], [0, 0, 1, 1], [], []>} : vector<6x256xf32>, vector<256x8xf32>, vector<6x8xf32> -> vector<6x8xf32>
    %cst_18 = arith.constant 1.000000e-24 : f32
    %35 = vector.broadcast %cst_18 : f32 to vector<6x8xf32>
    %36 = arith.maximumf %34, %35 : vector<6x8xf32>
    %37 = math.rsqrt %36 : vector<6x8xf32>
    %38 = vector.broadcast %0 : vector<1x8xf32> to vector<6x8xf32>
    %39 = arith.mulf %37, %38 : vector<6x8xf32>
    %cst_19 = arith.constant dense<0.000000e+00> : vector<6x256xf32>
    %40 = tpu.matmul %39, %1, %cst_19 {dimension_numbers = #tpu.dot_dimension_numbers<[1], [1], [0], [0], [0, 0, 1, 0], [], []>} : vector<6x8xf32>, vector<256x8xf32>, vector<6x256xf32> -> vector<6x256xf32>
    %41 = arith.mulf %32, %40 : vector<6x256xf32>
    %42 = arith.truncf %41 : vector<6x256xf32> to vector<6x256xbf16>
    %43 = arith.mulf %39, %39 : vector<6x8xf32>
    %44 = arith.mulf %43, %34 : vector<6x8xf32>
    %cst_20 = arith.constant dense<0.000000e+00> : vector<6xf32>
    %45 = vector.multi_reduction <add>, %44, %cst_20 [1] : vector<6x8xf32> to vector<6xf32>
    %46 = vector.shape_cast %45 : vector<6xf32> to vector<6x1xf32>
    %47 = arith.truncf %27 : vector<128x256xf32> to vector<128x256xbf16>
    %cst_21 = arith.constant dense<0.000000e+00> : vector<6x128xf32>
    %48 = tpu.matmul %42, %47, %cst_21 {dimension_numbers = #tpu.dot_dimension_numbers<[1], [1], [0], [0], [0, 0, 1, 0], [], []>} : vector<6x256xbf16>, vector<128x256xbf16>, vector<6x128xf32> -> vector<6x128xf32>
    %cst_22 = arith.constant 2.000000e+00 : f32
    %49 = vector.broadcast %cst_22 : f32 to vector<6x128xf32>
    %50 = arith.mulf %49, %48 : vector<6x128xf32>
    %51 = vector.broadcast %25 : vector<1x128xf32> to vector<6x128xf32>
    %52 = arith.mulf %50, %51 : vector<6x128xf32>
    %53 = vector.broadcast %46 : vector<6x1xf32> to vector<6x128xf32>
    %54 = arith.subf %52, %53 : vector<6x128xf32>
    %55 = arith.mulf %25, %25 : vector<1x128xf32>
    %56 = arith.mulf %30, %55 : vector<1x128xf32>
    %57 = vector.broadcast %56 : vector<1x128xf32> to vector<6x128xf32>
    %58 = arith.subf %54, %57 : vector<6x128xf32>
    %c0_23 = arith.constant 0 : index
    %c0_24 = arith.constant 0 : index
    %59 = vector.load %arg6[%c0_23, %c0_24] : memref<6x128xf32, #tpu.memory_space<vmem>>, vector<6x128xf32>
    tpu.vector_store %arg6[%c0_23, %c0_24], %58 {strides = array<i32>} : memref<6x128xf32, #tpu.memory_space<vmem>>, vector<6x128xf32>,
    return
  }
  func.func @transform_0(%arg0: i32) -> (i32, i32) {
    %c0_i32 = arith.constant 0 : i32
    %c0_i32_0 = arith.constant 0 : i32
    %c0_i32_1 = arith.constant 0 : i32
    return %c0_i32, %c0_i32_0 : i32, i32
  }
  func.func @transform_1(%arg0: i32) -> (i32, i32) {
    %c0_i32 = arith.constant 0 : i32
    %c0_i32_0 = arith.constant 0 : i32
    %c0_i32_1 = arith.constant 0 : i32
    return %c0_i32, %c0_i32_0 : i32, i32
  }
  func.func @transform_2(%arg0: i32) -> (i32, i32) {
    %c0_i32 = arith.constant 0 : i32
    %c0_i32_0 = arith.constant 0 : i32
    %c0_i32_1 = arith.constant 0 : i32
    return %c0_i32, %c0_i32_0 : i32, i32
  }
  func.func @transform_3(%arg0: i32) -> (i32, i32) {
    %c0_i32 = arith.constant 0 : i32
    %c0_i32_0 = arith.constant 0 : i32
    %c0_i32_1 = arith.constant 0 : i32
    return %c0_i32, %c0_i32_0 : i32, i32
  }
  func.func @transform_4(%arg0: i32) -> (i32, i32) {
    %c0_i32 = arith.constant 0 : i32
    %c0_i32_0 = arith.constant 0 : i32
    return %arg0, %c0_i32 : i32, i32
  }
  func.func @transform_5(%arg0: i32) -> (i32, i32) {
    %c0_i32 = arith.constant 0 : i32
    %c0_i32_0 = arith.constant 0 : i32
    return %arg0, %c0_i32 : i32, i32
  }
}

</mosaic_0001>

<llo_original>
// kernel: sur_model_forward.1
$region0: #{sur_model_forward.1}
  #allocation0 [shape = 'u32[]', space=smem, size = 0x4, offset = 0x4, fixed_abs, tag = 'smem constant byte address 0x4 - core index']
  #allocation1 [shape = 'u32[144,128]{1,0:T(1,128)}', space=vmem, size = 0x12000, scoped, tag = 'internal scratch']
  %s0 = inlined_call_operand.vmem [shape: f32[1,8], index: 0, kind: input, shape index: {}]
  %s1 = inlined_call_operand.vmem [shape: f32[256,8], index: 1, kind: input, shape index: {}]
  %s2 = inlined_call_operand.vmem [shape: s32[10,1], index: 2, kind: input, shape index: {}]
  %s3 = inlined_call_operand.vmem [shape: bf16[10,256], index: 3, kind: input, shape index: {}]
  %s4 = inlined_call_operand.vmem [shape: bf16[6,256], index: 4, kind: input, shape index: {}]
  %s5 = inlined_call_operand.hbm [shape: f32[6,128], index: 5, kind: output, shape index: {}]
  %s6 = sld [smem:[#allocation0]]
  $region30: #{sur_model_forward.1} parent=0
    _
  %s8 = ssub.s32 1, %s6
  %s9 = scalar_select 0, %s8, %s6
  $region1: #{sur_model_forward.1} parent=0
    #allocation2 [shape = 'u8[4096]{0}', space=vmem, size = 0x1000, scoped, tag = 'output window, operand 0, single buffered']
    #allocation3 [shape = 's32[1]{0}', space=sflag, size = 0x4, scoped, tag = 'scoped memory for sur_model_forward.1']
    %10 = vsyncpa [#allocation3], 0
    // Predicated region
    $region2: #{sur_model_forward.1} parent=1 // pred_check
      _
    $region3: #{sur_model_forward.1} parent=1 // pred_check_branch
      %12 = sbr.rel (0) target = $region5
    $region4: #{sur_model_forward.1} parent=1 // pred_region
      _
    $region5: #{sur_model_forward.1} parent=1 // pred_fallthru
      _
    // Predicated region
    $region6: #{sur_model_forward.1} parent=1 // pred_check
      _
    $region7: #{sur_model_forward.1} parent=1 // pred_check_branch
      %14 = sbr.rel (0) target = $region9
    $region8: #{sur_model_forward.1} parent=1 // pred_region
      _
    $region9: #{sur_model_forward.1} parent=1 // pred_fallthru
      _
    // Predicated region
    $region10: #{sur_model_forward.1} parent=1 // pred_check
      _
    $region11: #{sur_model_forward.1} parent=1 // pred_check_branch
      %16 = sbr.rel (0) target = $region13
    $region12: #{sur_model_forward.1} parent=1 // pred_region
      _
    $region13: #{sur_model_forward.1} parent=1 // pred_fallthru
      _
    // Predicated region
    $region14: #{sur_model_forward.1} parent=1 // pred_check
      _
    $region15: #{sur_model_forward.1} parent=1 // pred_check_branch
      %18 = sbr.rel (0) target = $region17
    $region16: #{sur_model_forward.1} parent=1 // pred_region
      _
    $region17: #{sur_model_forward.1} parent=1 // pred_fallthru
      _
    // Predicated region
    $region18: #{sur_model_forward.1} parent=1 // pred_check
      _
    $region19: #{sur_model_forward.1} parent=1 // pred_check_branch
      %20 = sbr.rel (0) target = $region21
    $region20: #{sur_model_forward.1} parent=1 // pred_region
      _
    $region21: #{sur_model_forward.1} parent=1 // pred_fallthru
      _
    %v22 = vld [vmem:[%s0] sm:$0x1]
    %v23 = vld [vmem:[%s1] sm:$0xff]
    %v24 = vld [vmem:[%s1 + $0x8] sm:$0xff]
    %v25 = vld [vmem:[%s1 + $0x10] sm:$0xff]
    %v26 = vld [vmem:[%s1 + $0x18] sm:$0xff]
    %v27 = vld [vmem:[%s1 + $0x20] sm:$0xff]
    %v28 = vld [vmem:[%s1 + $0x28] sm:$0xff]
    %v29 = vld [vmem:[%s1 + $0x30] sm:$0xff]
    %v30 = vld [vmem:[%s1 + $0x38] sm:$0xff]
    %v31 = vld [vmem:[%s1 + $0x40] sm:$0xff]
    %v32 = vld [vmem:[%s1 + $0x48] sm:$0xff]
    %v33 = vld [vmem:[%s1 + $0x50] sm:$0xff]
    %v34 = vld [vmem:[%s1 + $0x58] sm:$0xff]
    %v35 = vld [vmem:[%s1 + $0x60] sm:$0xff]
    %v36 = vld [vmem:[%s1 + $0x68] sm:$0xff]
    %v37 = vld [vmem:[%s1 + $0x70] sm:$0xff]
    %v38 = vld [vmem:[%s1 + $0x78] sm:$0xff]
    %v39 = vld [vmem:[%s1 + $0x80] sm:$0xff]
    %v40 = vld [vmem:[%s1 + $0x88] sm:$0xff]
    %v41 = vld [vmem:[%s1 + $0x90] sm:$0xff]
    %v42 = vld [vmem:[%s1 + $0x98] sm:$0xff]
    %v43 = vld [vmem:[%s1 + $0xa0] sm:$0xff]
    %v44 = vld [vmem:[%s1 + $0xa8] sm:$0xff]
    %v45 = vld [vmem:[%s1 + $0xb0] sm:$0xff]
    %v46 = vld [vmem:[%s1 + $0xb8] sm:$0xff]
    %v47 = vld [vmem:[%s1 + $0xc0] sm:$0xff]
    %v48 = vld [vmem:[%s1 + $0xc8] sm:$0xff]
    %v49 = vld [vmem:[%s1 + $0xd0] sm:$0xff]
    %v50 = vld [vmem:[%s1 + $0xd8] sm:$0xff]
    %v51 = vld [vmem:[%s1 + $0xe0] sm:$0xff]
    %v52 = vld [vmem:[%s1 + $0xe8] sm:$0xff]
    %v53 = vld [vmem:[%s1 + $0xf0] sm:$0xff]
    %v54 = vld [vmem:[%s1 + $0xf8] sm:$0xff]
    %v55 = vld [vmem:[%s3] sm:$0xff]
    %v56 = vld [vmem:[%s3 + $0x8] sm:$0x11]
    %v57 = vunpack.c.l.bf16 %v55
    %v58 = vunpack.c.h.bf16 %v55
    %v59 = vunpack.c.l.bf16 %v56
    %v60 = vunpack.c.h.bf16 %v56
    %v61 = vmul.f32 %v57, %v57
    %v62 = vmul.f32 %v58, %v58
    %v63 = vmul.f32 %v59, %v59
    %v64 = vmul.f32 %v60, %v60
    %65 = vmatprep.subr.mxu0 0.0
    %66 = vmatpush1.msra.mxu0 %v23
    %67 = vmatprep.subr.mxu0 0.0
    %68 = vmatpush1.msra.mxu0 %v24
    %69 = vmatprep.subr.mxu0 0.0
    %70 = vmatpush1.msra.mxu0 %v25
    %71 = vmatprep.subr.mxu0 0.0
    %72 = vmatpush1.msra.mxu0 %v26
    %73 = vmatprep.subr.mxu0 0.0
    %74 = vmatpush1.msra.mxu0 %v27
    %75 = vmatprep.subr.mxu0 0.0
    %76 = vmatpush1.msra.mxu0 %v28
    %77 = vmatprep.subr.mxu0 0.0
    %78 = vmatpush1.msra.mxu0 %v29
    %79 = vmatprep.subr.mxu0 0.0
    %80 = vmatpush1.msra.mxu0 %v30
    %81 = vmatprep.subr.mxu0 0.0
    %82 = vmatpush1.msra.mxu0 %v31
    %83 = vmatprep.subr.mxu0 0.0
    %84 = vmatpush1.msra.mxu0 %v32
    %85 = vmatprep.subr.mxu0 0.0
    %86 = vmatpush1.msra.mxu0 %v33
    %87 = vmatprep.subr.mxu0 0.0
    %88 = vmatpush1.msra.mxu0 %v34
    %89 = vmatprep.subr.mxu0 0.0
    %90 = vmatpush1.msra.mxu0 %v35
    %91 = vmatprep.subr.mxu0 0.0
    %92 = vmatpush1.msra.mxu0 %v36
    %93 = vmatprep.subr.mxu0 0.0
    %94 = vmatpush1.msra.mxu0 %v37
    %95 = vmatprep.subr.mxu0 0.0
    %96 = vmatpush1.msra.mxu0 %v38
    %97 = vmatprep.subr.mxu0 0.0
    %98 = vmatpush1.msra.mxu0 %v39
    %99 = vmatprep.subr.mxu0 0.0
    %100 = vmatpush1.msra.mxu0 %v40
    %101 = vmatprep.subr.mxu0 0.0
    %102 = vmatpush1.msra.mxu0 %v41
    %103 = vmatprep.subr.mxu0 0.0
    %104 = vmatpush1.msra.mxu0 %v42
    %105 = vmatprep.subr.mxu0 0.0
    %106 = vmatpush1.msra.mxu0 %v43
    %107 = vmatprep.subr.mxu0 0.0
    %108 = vmatpush1.msra.mxu0 %v44
    %109 = vmatprep.subr.mxu0 0.0
    %110 = vmatpush1.msra.mxu0 %v45
    %111 = vmatprep.subr.mxu0 0.0
    %112 = vmatpush1.msra.mxu0 %v46
    %113 = vmatprep.subr.mxu0 0.0
    %114 = vmatpush1.msra.mxu0 %v47
    %115 = vmatprep.subr.mxu0 0.0
    %116 = vmatpush1.msra.mxu0 %v48
    %117 = vmatprep.subr.mxu0 0.0
    %118 = vmatpush1.msra.mxu0 %v49
    %119 = vmatprep.subr.mxu0 0.0
    %120 = vmatpush1.msra.mxu0 %v50
    %121 = vmatprep.subr.mxu0 0.0
    %122 = vmatpush1.msra.mxu0 %v51
    %123 = vmatprep.subr.mxu0 0.0
    %124 = vmatpush1.msra.mxu0 %v52
    %125 = vmatprep.subr.mxu0 0.0
    %126 = vmatpush1.msra.mxu0 %v53
    %127 = vmatprep.subr.mxu0 0.0
    %128 = vmatpush1.msra.mxu0 %v54
    %129 = vmatprep.mubr.f32.mxu0 %v62
    %130 = vmatmul.mubr.f32.gmra.mrb[0].mxu0 %v61
    %v131 = vpop.f32.mrb[0].mxu0
    %v132 = vadd.f32 0.0, %v131
    %v133 = vpop.f32.mrb[0].mxu0
    %134 = vmatprep.mubr.f32.mxu0 %v64
    %135 = vmatmul.mubr.f32.gmra.mrb[0].mxu0 %v63
    %v136 = vpop.f32.mrb[0].mxu0
    %v137 = vadd.f32 0.0, %v136
    %v138 = vpop.f32.mrb[0].mxu0
    %139 = vdwg.mxu0
    %v140 = vmax.f32 %v132, 1e-24
    %v141 = vmax.f32 %v137, 1e-24
    %v142 = vrsqrt.pop %v140
    %v143 = vrsqrt.pop %v141
    %v145 = vlaneseq
    %v146 = vshrl.u32 %v145, 7
    %v147 = vsub.s32 0, %v146
    %v148 = vrot.slane %v22, %v147
    %v150 = vmul.f32 %v142, %v148
    %v151 = vmul.f32 %v143, %v148
    %vm152 = vcmask 64512
    %v154 = vsel %vm152, %v150, 0
    %v157 = vsel %vm152, %v151, 0
    %v160 = vsel %vm152, %v23, 0
    %v163 = vsel %vm152, %v24, 0
    %v166 = vsel %vm152, %v25, 0
    %v169 = vsel %vm152, %v26, 0
    %v172 = vsel %vm152, %v27, 0
    %v175 = vsel %vm152, %v28, 0
    %v178 = vsel %vm152, %v29, 0
    %v181 = vsel %vm152, %v30, 0
    %v184 = vsel %vm152, %v31, 0
    %v187 = vsel %vm152, %v32, 0
    %v190 = vsel %vm152, %v33, 0
    %v193 = vsel %vm152, %v34, 0
    %v196 = vsel %vm152, %v35, 0
    %v199 = vsel %vm152, %v36, 0
    %v202 = vsel %vm152, %v37, 0
    %v205 = vsel %vm152, %v38, 0
    %v208 = vsel %vm152, %v39, 0
    %v211 = vsel %vm152, %v40, 0
    %v214 = vsel %vm152, %v41, 0
    %v217 = vsel %vm152, %v42, 0
    %v220 = vsel %vm152, %v43, 0
    %v223 = vsel %vm152, %v44, 0
    %v226 = vsel %vm152, %v45, 0
    %v229 = vsel %vm152, %v46, 0
    %v232 = vsel %vm152, %v47, 0
    %v235 = vsel %vm152, %v48, 0
    %v238 = vsel %vm152, %v49, 0
    %v241 = vsel %vm152, %v50, 0
    %v244 = vsel %vm152, %v51, 0
    %v247 = vsel %vm152, %v52, 0
    %v250 = vsel %vm152, %v53, 0
    %v253 = vsel %vm152, %v54, 0
    %255 = vmatprep.subr.mxu0 0.0
    %256 = vmatpush1.xpose.msra.mxu0 %v160
    %257 = vmatprep.subr.mxu0 0.0
    %258 = vmatpush1.xpose.msra.mxu0 %v163
    %259 = vmatprep.subr.mxu0 0.0
    %260 = vmatpush1.xpose.msra.mxu0 %v166
    %261 = vmatprep.subr.mxu0 0.0
    %262 = vmatpush1.xpose.msra.mxu0 %v169
    %263 = vmatprep.subr.mxu0 0.0
    %264 = vmatpush1.xpose.msra.mxu0 %v172
    %265 = vmatprep.subr.mxu0 0.0
    %266 = vmatpush1.xpose.msra.mxu0 %v175
    %267 = vmatprep.subr.mxu0 0.0
    %268 = vmatpush1.xpose.msra.mxu0 %v178
    %269 = vmatprep.subr.mxu0 0.0
    %270 = vmatpush1.xpose.msra.mxu0 %v181
    %271 = vmatprep.subr.mxu0 0.0
    %272 = vmatpush1.xpose.msra.mxu0 %v184
    %273 = vmatprep.subr.mxu0 0.0
    %274 = vmatpush1.xpose.msra.mxu0 %v187
    %275 = vmatprep.subr.mxu0 0.0
    %276 = vmatpush1.xpose.msra.mxu0 %v190
    %277 = vmatprep.subr.mxu0 0.0
    %278 = vmatpush1.xpose.msra.mxu0 %v193
    %279 = vmatprep.subr.mxu0 0.0
    %280 = vmatpush1.xpose.msra.mxu0 %v196
    %281 = vmatprep.subr.mxu0 0.0
    %282 = vmatpush1.xpose.msra.mxu0 %v199
    %283 = vmatprep.subr.mxu0 0.0
    %284 = vmatpush1.xpose.msra.mxu0 %v202
    %285 = vmatprep.subr.mxu0 0.0
    %286 = vmatpush1.xpose.msra.mxu0 %v205
    %287 = vmatprep.subr.mxu0 0.0
    %288 = vmatpush1.xpose.msra.mxu0 %v208
    %289 = vmatprep.subr.mxu0 0.0
    %290 = vmatpush1.xpose.msra.mxu0 %v211
    %291 = vmatprep.subr.mxu0 0.0
    %292 = vmatpush1.xpose.msra.mxu0 %v214
    %293 = vmatprep.subr.mxu0 0.0
    %294 = vmatpush1.xpose.msra.mxu0 %v217
    %295 = vmatprep.subr.mxu0 0.0
    %296 = vmatpush1.xpose.msra.mxu0 %v220
    %297 = vmatprep.subr.mxu0 0.0
    %298 = vmatpush1.xpose.msra.mxu0 %v223
    %299 = vmatprep.subr.mxu0 0.0
    %300 = vmatpush1.xpose.msra.mxu0 %v226
    %301 = vmatprep.subr.mxu0 0.0
    %302 = vmatpush1.xpose.msra.mxu0 %v229
    %303 = vmatprep.subr.mxu0 0.0
    %304 = vmatpush1.xpose.msra.mxu0 %v232
    %305 = vmatprep.subr.mxu0 0.0
    %306 = vmatpush1.xpose.msra.mxu0 %v235
    %307 = vmatprep.subr.mxu0 0.0
    %308 = vmatpush1.xpose.msra.mxu0 %v238
    %309 = vmatprep.subr.mxu0 0.0
    %310 = vmatpush1.xpose.msra.mxu0 %v241
    %311 = vmatprep.subr.mxu0 0.0
    %312 = vmatpush1.xpose.msra.mxu0 %v244
    %313 = vmatprep.subr.mxu0 0.0
    %314 = vmatpush1.xpose.msra.mxu0 %v247
    %315 = vmatprep.subr.mxu0 0.0
    %316 = vmatpush1.xpose.msra.mxu0 %v250
    %317 = vmatprep.subr.mxu0 0.0
    %318 = vmatpush1.xpose.msra.mxu0 %v253
    %319 = vmatprep.mubr.f32.mxu0 0.0
    %320 = vmatmul.mubr.f32.gmra.mrb[0].mxu0 %v154
    %v321 = vpop.f32.mrb[0].mxu0
    %v322 = vadd.f32 0.0, %v321
    %v323 = vpop.f32.mrb[0].mxu0
    %v324 = vadd.f32 0.0, %v323
    %325 = vmatprep.mubr.f32.mxu0 0.0
    %326 = vmatmul.mubr.f32.gmra.mrb[0].mxu0 %v157
    %v327 = vpop.f32.mrb[0].mxu0
    %v328 = vadd.f32 0.0, %v327
    %v329 = vpop.f32.mrb[0].mxu0
    %v330 = vadd.f32 0.0, %v329
    %331 = vdwg.mxu0
    %v332 = vmul.f32 %v57, %v322
    %v333 = vmul.f32 %v58, %v324
    %v334 = vmul.f32 %v59, %v328
    %v335 = vmul.f32 %v60, %v330
    %v336 = vpack.c.bf16 %v334, %v332
    %v337 = vpack.c.bf16 %v335, %v333
    %v338 = vld [vmem:[%s2] sm:$0xff]
    %v339 = vld [vmem:[%s2 + $0x8] sm:$0x3]
    %v340 = vlaneseq
    %v341 = vand.u32 %v340, 127
    %342 = vset.pattern.permute.xlu0 0
    %343 = vperm.xlu0 %342, %v338
    %v344 = vpop.permute.xlu0 %343
    %345 = vset.pattern.permute.xlu0 0
    %346 = vperm.xlu0 %345, %v339
    %v347 = vpop.permute.xlu0 %346
    %vm348 = vcmp.eq.s32.totalorder %v344, %v341
    %vm349 = vcmp.eq.s32.totalorder %v347, %v341
    %v350 = vsel %vm348, 1, 0
    %v351 = vsel %vm349, 1, 0
    %v352 = vcvt.s32.f32 %v350
    %v353 = vcvt.s32.f32 %v351
    %vm354 = vcmask 1041408
    %v355 = vsel %vm354, %v353, 0.0
    %v356 = vadd.f32 %v352, %v355
    %v357 = vrot.slane %v356, 4
    %v358 = vadd.f32 %v356, %v357
    %v359 = vrot.slane %v358, 2
    %v360 = vadd.f32 %v358, %v359
    %v361 = vrot.slane %v360, 1
    %v362 = vadd.f32 %v360, %v361
    %v363 = vmax.f32 %v362, 1.0
    %v364 = vrcp.pop %v363
    %v365 = vmul.f32 1.0, %v364
    %v366 = vpack.c.bf16 %v353, %v352
    %367 = vxpose.xlu0.c.b16.start [1/8] %v366, 128
    %368 = vxpose.xlu0.c.b16.cont [2/8] 0, 128
    %369 = vxpose.xlu0.c.b16.cont [3/8] 0, 128
    %370 = vxpose.xlu0.c.b16.cont [4/8] 0, 128
    %371 = vxpose.xlu0.c.b16.cont [5/8] 0, 128
    %372 = vxpose.xlu0.c.b16.cont [6/8] 0, 128
    %373 = vxpose.xlu0.c.b16.cont [7/8] 0, 128
    %374 = vxpose.xlu0.c.b16.end [8/8] 0, 128
    %v375 = vpop.trf.xlu0
    %v376 = vpop.trf.xlu0
    %v377 = vpop.trf.xlu0
    %v378 = vpop.trf.xlu0
    %v379 = vpop.trf.xlu0
    %v380 = vpop.trf.xlu0
    %v381 = vpop.trf.xlu0
    %v382 = vpop.trf.xlu0
    %vm383 = vcmask 80896
    %v385 = vsel %vm383, %v375, 0
    %v388 = vsel %vm383, %v376, 0
    %v391 = vsel %vm383, %v377, 0
    %v394 = vsel %vm383, %v378, 0
    %v397 = vsel %vm383, %v379, 0
    %v400 = vsel %vm383, %v380, 0
    %v403 = vsel %vm383, %v381, 0
    %v406 = vsel %vm383, %v382, 0
    %vm408 = vcmask 1044480
    %v410 = vsel %vm408, %v336, 0
    %v413 = vsel %vm408, %v337, 0
    %415 = vmatprep.subr.bf16.mxu0 %v413
    %416 = vmatpush1.bf16.msra.mxu0 %v410
    %417 = vmatprep.subr.bf16.mxu0 0
    %418 = vmatpush1.bf16.msra.mxu0 0
    %419 = vmatprep.subr.bf16.mxu0 0
    %420 = vmatpush1.bf16.msra.mxu0 0
    %421 = vmatprep.subr.bf16.mxu0 0
    %422 = vmatpush1.bf16.msra.mxu0 0
    %423 = vmatprep.subr.bf16.mxu0 0
    %424 = vmatpush1.bf16.msra.mxu0 0
    %425 = vmatprep.subr.bf16.mxu0 0
    %426 = vmatpush1.bf16.msra.mxu0 0
    %427 = vmatprep.subr.bf16.mxu0 0
    %428 = vmatpush1.bf16.msra.mxu0 0
    %429 = vmatprep.subr.bf16.mxu0 0
    %430 = vmatpush1.bf16.msra.mxu0 0
    %431 = vmatprep.subr.bf16.mxu0 0
    %432 = vmatpush1.bf16.msra.mxu0 0
    %433 = vmatprep.subr.bf16.mxu0 0
    %434 = vmatpush1.bf16.msra.mxu0 0
    %435 = vmatprep.subr.bf16.mxu0 0
    %436 = vmatpush1.bf16.msra.mxu0 0
    %437 = vmatprep.subr.bf16.mxu0 0
    %438 = vmatpush1.bf16.msra.mxu0 0
    %439 = vmatprep.subr.bf16.mxu0 0
    %440 = vmatpush1.bf16.msra.mxu0 0
    %441 = vmatprep.subr.bf16.mxu0 0
    %442 = vmatpush1.bf16.msra.mxu0 0
    %443 = vmatprep.subr.bf16.mxu0 0
    %444 = vmatpush1.bf16.msra.mxu0 0
    %445 = vmatprep.subr.bf16.mxu0 0
    %446 = vmatpush1.bf16.msra.mxu0 0
    %447 = vmatprep.mubr.bf16.mxu0 0
    %448 = vmatmul.mubr.bf16.gmra.mrb[0].mxu0 %v385
    %v449 = vpop.f32.mrb[0].mxu0
    %v450 = vadd.f32 0.0, %v449
    %v451 = vpop.f32.mrb[0].mxu0
    %v452 = vadd.f32 0.0, %v451
    %v453 = vpop.f32.mrb[0].mxu0
    %v454 = vadd.f32 0.0, %v453
    %v455 = vpop.f32.mrb[0].mxu0
    %v456 = vadd.f32 0.0, %v455
    %457 = vmatprep.mubr.bf16.mxu0 0
    %458 = vmatmul.mubr.bf16.gmra.mrb[0].mxu0 %v388
    %v459 = vpop.f32.mrb[0].mxu0
    %v460 = vadd.f32 0.0, %v459
    %v461 = vpop.f32.mrb[0].mxu0
    %v462 = vadd.f32 0.0, %v461
    %v463 = vpop.f32.mrb[0].mxu0
    %v464 = vadd.f32 0.0, %v463
    %v465 = vpop.f32.mrb[0].mxu0
    %v466 = vadd.f32 0.0, %v465
    %467 = vmatprep.mubr.bf16.mxu0 0
    %468 = vmatmul.mubr.bf16.gmra.mrb[0].mxu0 %v391
    %v469 = vpop.f32.mrb[0].mxu0
    %v470 = vadd.f32 0.0, %v469
    %v471 = vpop.f32.mrb[0].mxu0
    %v472 = vadd.f32 0.0, %v471
    %v473 = vpop.f32.mrb[0].mxu0
    %v474 = vadd.f32 0.0, %v473
    %v475 = vpop.f32.mrb[0].mxu0
    %v476 = vadd.f32 0.0, %v475
    %477 = vmatprep.mubr.bf16.mxu0 0
    %478 = vmatmul.mubr.bf16.gmra.mrb[0].mxu0 %v394
    %v479 = vpop.f32.mrb[0].mxu0
    %v480 = vadd.f32 0.0, %v479
    %v481 = vpop.f32.mrb[0].mxu0
    %v482 = vadd.f32 0.0, %v481
    %v483 = vpop.f32.mrb[0].mxu0
    %v484 = vadd.f32 0.0, %v483
    %v485 = vpop.f32.mrb[0].mxu0
    %v486 = vadd.f32 0.0, %v485
    %487 = vmatprep.mubr.bf16.mxu0 0
    %488 = vmatmul.mubr.bf16.gmra.mrb[0].mxu0 %v397
    %v489 = vpop.f32.mrb[0].mxu0
    %v490 = vadd.f32 0.0, %v489
    %v491 = vpop.f32.mrb[0].mxu0
    %v492 = vadd.f32 0.0, %v491
    %v493 = vpop.f32.mrb[0].mxu0
    %v494 = vadd.f32 0.0, %v493
    %v495 = vpop.f32.mrb[0].mxu0
    %v496 = vadd.f32 0.0, %v495
    %497 = vmatprep.mubr.bf16.mxu0 0
    %498 = vmatmul.mubr.bf16.gmra.mrb[0].mxu0 %v400
    %v499 = vpop.f32.mrb[0].mxu0
    %v500 = vadd.f32 0.0, %v499
    %v501 = vpop.f32.mrb[0].mxu0
    %v502 = vadd.f32 0.0, %v501
    %v503 = vpop.f32.mrb[0].mxu0
    %v504 = vadd.f32 0.0, %v503
    %v505 = vpop.f32.mrb[0].mxu0
    %v506 = vadd.f32 0.0, %v505
    %507 = vmatprep.mubr.bf16.mxu0 0
    %508 = vmatmul.mubr.bf16.gmra.mrb[0].mxu0 %v403
    %v509 = vpop.f32.mrb[0].mxu0
    %v510 = vadd.f32 0.0, %v509
    %v511 = vpop.f32.mrb[0].mxu0
    %v512 = vadd.f32 0.0, %v511
    %v513 = vpop.f32.mrb[0].mxu0
    %v514 = vadd.f32 0.0, %v513
    %v515 = vpop.f32.mrb[0].mxu0
    %v516 = vadd.f32 0.0, %v515
    %517 = vmatprep.mubr.bf16.mxu0 0
    %518 = vmatmul.mubr.bf16.gmra.mrb[0].mxu0 %v406
    %v519 = vpop.f32.mrb[0].mxu0
    %v520 = vadd.f32 0.0, %v519
    %v521 = vpop.f32.mrb[0].mxu0
    %v522 = vadd.f32 0.0, %v521
    %v523 = vpop.f32.mrb[0].mxu0
    %v524 = vadd.f32 0.0, %v523
    %v525 = vpop.f32.mrb[0].mxu0
    %v526 = vadd.f32 0.0, %v525
    %527 = vdwg.mxu0
    %v528 = vmul.f32 %v450, %v450
    %v529 = vmul.f32 %v452, %v452
    %v530 = vmul.f32 %v454, %v454
    %v531 = vmul.f32 %v456, %v456
    %v532 = vmul.f32 %v460, %v460
    %v533 = vmul.f32 %v462, %v462
    %v534 = vmul.f32 %v464, %v464
    %v535 = vmul.f32 %v466, %v466
    %v536 = vmul.f32 %v470, %v470
    %v537 = vmul.f32 %v472, %v472
    %v538 = vmul.f32 %v474, %v474
    %v539 = vmul.f32 %v476, %v476
    %v540 = vmul.f32 %v480, %v480
    %v541 = vmul.f32 %v482, %v482
    %v542 = vmul.f32 %v484, %v484
    %v543 = vmul.f32 %v486, %v486
    %v544 = vmul.f32 %v490, %v490
    %v545 = vmul.f32 %v492, %v492
    %v546 = vmul.f32 %v494, %v494
    %v547 = vmul.f32 %v496, %v496
    %v548 = vmul.f32 %v500, %v500
    %v549 = vmul.f32 %v502, %v502
    %v550 = vmul.f32 %v504, %v504
    %v551 = vmul.f32 %v506, %v506
    %v552 = vmul.f32 %v510, %v510
    %v553 = vmul.f32 %v512, %v512
    %v554 = vmul.f32 %v514, %v514
    %v555 = vmul.f32 %v516, %v516
    %v556 = vmul.f32 %v520, %v520
    %v557 = vmul.f32 %v522, %v522
    %v558 = vmul.f32 %v524, %v524
    %v559 = vmul.f32 %v526, %v526
    %560 = vmatprep.subr.mxu0 %v529
    %561 = vmatpush1.xpose.msra.mxu0 %v528
    %562 = vmatprep.subr.mxu0 %v531
    %563 = vmatpush1.xpose.msra.mxu0 %v530
    %564 = vmatprep.subr.mxu0 %v533
    %565 = vmatpush1.xpose.msra.mxu0 %v532
    %566 = vmatprep.subr.mxu0 %v535
    %567 = vmatpush1.xpose.msra.mxu0 %v534
    %568 = vmatprep.subr.mxu0 %v537
    %569 = vmatpush1.xpose.msra.mxu0 %v536
    %570 = vmatprep.subr.mxu0 %v539
    %571 = vmatpush1.xpose.msra.mxu0 %v538
    %572 = vmatprep.subr.mxu0 %v541
    %573 = vmatpush1.xpose.msra.mxu0 %v540
    %574 = vmatprep.subr.mxu0 %v543
    %575 = vmatpush1.xpose.msra.mxu0 %v542
    %576 = vmatprep.subr.mxu0 %v545
    %577 = vmatpush1.xpose.msra.mxu0 %v544
    %578 = vmatprep.subr.mxu0 %v547
    %579 = vmatpush1.xpose.msra.mxu0 %v546
    %580 = vmatprep.subr.mxu0 %v549
    %581 = vmatpush1.xpose.msra.mxu0 %v548
    %582 = vmatprep.subr.mxu0 %v551
    %583 = vmatpush1.xpose.msra.mxu0 %v550
    %584 = vmatprep.subr.mxu0 %v553
    %585 = vmatpush1.xpose.msra.mxu0 %v552
    %586 = vmatprep.subr.mxu0 %v555
    %587 = vmatpush1.xpose.msra.mxu0 %v554
    %588 = vmatprep.subr.mxu0 %v557
    %589 = vmatpush1.xpose.msra.mxu0 %v556
    %590 = vmatprep.subr.mxu0 %v559
    %591 = vmatpush1.xpose.msra.mxu0 %v558
    %592 = vmatprep.subr.mxu0 0.0
    %593 = vmatpush1.xpose.msra.mxu0 0.0
    %594 = vmatprep.subr.mxu0 0.0
    %595 = vmatpush1.xpose.msra.mxu0 0.0
    %596 = vmatprep.subr.mxu0 0.0
    %597 = vmatpush1.xpose.msra.mxu0 0.0
    %598 = vmatprep.subr.mxu0 0.0
    %599 = vmatpush1.xpose.msra.mxu0 0.0
    %600 = vmatprep.subr.mxu0 0.0
    %601 = vmatpush1.xpose.msra.mxu0 0.0
    %602 = vmatprep.subr.mxu0 0.0
    %603 = vmatpush1.xpose.msra.mxu0 0.0
    %604 = vmatprep.subr.mxu0 0.0
    %605 = vmatpush1.xpose.msra.mxu0 0.0
    %606 = vmatprep.subr.mxu0 0.0
    %607 = vmatpush1.xpose.msra.mxu0 0.0
    %608 = vmatprep.subr.mxu0 0.0
    %609 = vmatpush1.xpose.msra.mxu0 0.0
    %610 = vmatprep.subr.mxu0 0.0
    %611 = vmatpush1.xpose.msra.mxu0 0.0
    %612 = vmatprep.subr.mxu0 0.0
    %613 = vmatpush1.xpose.msra.mxu0 0.0
    %614 = vmatprep.subr.mxu0 0.0
    %615 = vmatpush1.xpose.msra.mxu0 0.0
    %616 = vmatprep.subr.mxu0 0.0
    %617 = vmatpush1.xpose.msra.mxu0 0.0
    %618 = vmatprep.subr.mxu0 0.0
    %619 = vmatpush1.xpose.msra.mxu0 0.0
    %620 = vmatprep.subr.mxu0 0.0
    %621 = vmatpush1.xpose.msra.mxu0 0.0
    %622 = vmatprep.subr.mxu0 0.0
    %623 = vmatpush1.xpose.msra.mxu0 0.0
    %624 = vmatprep.mubr.f32.mxu0 1.0
    %625 = vmatmul.mubr.f32.gmra.mrb[0].mxu0 1.0
    %v626 = vpop.f32.mrb[0].mxu0
    %v627 = vadd.f32 0.0, %v626
    %v628 = vpop.f32.mrb[0].mxu0
    %629 = vdwg.mxu0
    %v630 = vld [vmem:[%s4] sm:$0x77]
    %v631 = vunpack.c.l.bf16 %v630
    %v632 = vunpack.c.h.bf16 %v630
    %v633 = vmul.f32 %v631, %v631
    %v634 = vmul.f32 %v632, %v632
    %635 = vmatprep.subr.mxu0 0.0
    %636 = vmatpush1.msra.mxu0 %v23
    %637 = vmatprep.subr.mxu0 0.0
    %638 = vmatpush1.msra.mxu0 %v24
    %639 = vmatprep.subr.mxu0 0.0
    %640 = vmatpush1.msra.mxu0 %v25
    %641 = vmatprep.subr.mxu0 0.0
    %642 = vmatpush1.msra.mxu0 %v26
    %643 = vmatprep.subr.mxu0 0.0
    %644 = vmatpush1.msra.mxu0 %v27
    %645 = vmatprep.subr.mxu0 0.0
    %646 = vmatpush1.msra.mxu0 %v28
    %647 = vmatprep.subr.mxu0 0.0
    %648 = vmatpush1.msra.mxu0 %v29
    %649 = vmatprep.subr.mxu0 0.0
    %650 = vmatpush1.msra.mxu0 %v30
    %651 = vmatprep.subr.mxu0 0.0
    %652 = vmatpush1.msra.mxu0 %v31
    %653 = vmatprep.subr.mxu0 0.0
    %654 = vmatpush1.msra.mxu0 %v32
    %655 = vmatprep.subr.mxu0 0.0
    %656 = vmatpush1.msra.mxu0 %v33
    %657 = vmatprep.subr.mxu0 0.0
    %658 = vmatpush1.msra.mxu0 %v34
    %659 = vmatprep.subr.mxu0 0.0
    %660 = vmatpush1.msra.mxu0 %v35
    %661 = vmatprep.subr.mxu0 0.0
    %662 = vmatpush1.msra.mxu0 %v36
    %663 = vmatprep.subr.mxu0 0.0
    %664 = vmatpush1.msra.mxu0 %v37
    %665 = vmatprep.subr.mxu0 0.0
    %666 = vmatpush1.msra.mxu0 %v38
    %667 = vmatprep.subr.mxu0 0.0
    %668 = vmatpush1.msra.mxu0 %v39
    %669 = vmatprep.subr.mxu0 0.0
    %670 = vmatpush1.msra.mxu0 %v40
    %671 = vmatprep.subr.mxu0 0.0
    %672 = vmatpush1.msra.mxu0 %v41
    %673 = vmatprep.subr.mxu0 0.0
    %674 = vmatpush1.msra.mxu0 %v42
    %675 = vmatprep.subr.mxu0 0.0
    %676 = vmatpush1.msra.mxu0 %v43
    %677 = vmatprep.subr.mxu0 0.0
    %678 = vmatpush1.msra.mxu0 %v44
    %679 = vmatprep.subr.mxu0 0.0
    %680 = vmatpush1.msra.mxu0 %v45
    %681 = vmatprep.subr.mxu0 0.0
    %682 = vmatpush1.msra.mxu0 %v46
    %683 = vmatprep.subr.mxu0 0.0
    %684 = vmatpush1.msra.mxu0 %v47
    %685 = vmatprep.subr.mxu0 0.0
    %686 = vmatpush1.msra.mxu0 %v48
    %687 = vmatprep.subr.mxu0 0.0
    %688 = vmatpush1.msra.mxu0 %v49
    %689 = vmatprep.subr.mxu0 0.0
    %690 = vmatpush1.msra.mxu0 %v50
    %691 = vmatprep.subr.mxu0 0.0
    %692 = vmatpush1.msra.mxu0 %v51
    %693 = vmatprep.subr.mxu0 0.0
    %694 = vmatpush1.msra.mxu0 %v52
    %695 = vmatprep.subr.mxu0 0.0
    %696 = vmatpush1.msra.mxu0 %v53
    %697 = vmatprep.subr.mxu0 0.0
    %698 = vmatpush1.msra.mxu0 %v54
    %699 = vmatprep.mubr.f32.mxu0 %v634
    %700 = vmatmul.mubr.f32.gmra.mrb[0].mxu0 %v633
    %v701 = vpop.f32.mrb[0].mxu0
    %v702 = vadd.f32 0.0, %v701
    %v703 = vpop.f32.mrb[0].mxu0
    %704 = vdwg.mxu0
    %v705 = vmax.f32 %v702, 1e-24
    %v706 = vrsqrt.pop %v705
    %v707 = vmul.f32 %v706, %v148
    %v709 = vsel %vm152, %v707, 0
    %711 = vmatprep.subr.mxu0 0.0
    %712 = vmatpush1.xpose.msra.mxu0 %v160
    %713 = vmatprep.subr.mxu0 0.0
    %714 = vmatpush1.xpose.msra.mxu0 %v163
    %715 = vmatprep.subr.mxu0 0.0
    %716 = vmatpush1.xpose.msra.mxu0 %v166
    %717 = vmatprep.subr.mxu0 0.0
    %718 = vmatpush1.xpose.msra.mxu0 %v169
    %719 = vmatprep.subr.mxu0 0.0
    %720 = vmatpush1.xpose.msra.mxu0 %v172
    %721 = vmatprep.subr.mxu0 0.0
    %722 = vmatpush1.xpose.msra.mxu0 %v175
    %723 = vmatprep.subr.mxu0 0.0
    %724 = vmatpush1.xpose.msra.mxu0 %v178
    %725 = vmatprep.subr.mxu0 0.0
    %726 = vmatpush1.xpose.msra.mxu0 %v181
    %727 = vmatprep.subr.mxu0 0.0
    %728 = vmatpush1.xpose.msra.mxu0 %v184
    %729 = vmatprep.subr.mxu0 0.0
    %730 = vmatpush1.xpose.msra.mxu0 %v187
    %731 = vmatprep.subr.mxu0 0.0
    %732 = vmatpush1.xpose.msra.mxu0 %v190
    %733 = vmatprep.subr.mxu0 0.0
    %734 = vmatpush1.xpose.msra.mxu0 %v193
    %735 = vmatprep.subr.mxu0 0.0
    %736 = vmatpush1.xpose.msra.mxu0 %v196
    %737 = vmatprep.subr.mxu0 0.0
    %738 = vmatpush1.xpose.msra.mxu0 %v199
    %739 = vmatprep.subr.mxu0 0.0
    %740 = vmatpush1.xpose.msra.mxu0 %v202
    %741 = vmatprep.subr.mxu0 0.0
    %742 = vmatpush1.xpose.msra.mxu0 %v205
    %743 = vmatprep.subr.mxu0 0.0
    %744 = vmatpush1.xpose.msra.mxu0 %v208
    %745 = vmatprep.subr.mxu0 0.0
    %746 = vmatpush1.xpose.msra.mxu0 %v211
    %747 = vmatprep.subr.mxu0 0.0
    %748 = vmatpush1.xpose.msra.mxu0 %v214
    %749 = vmatprep.subr.mxu0 0.0
    %750 = vmatpush1.xpose.msra.mxu0 %v217
    %751 = vmatprep.subr.mxu0 0.0
    %752 = vmatpush1.xpose.msra.mxu0 %v220
    %753 = vmatprep.subr.mxu0 0.0
    %754 = vmatpush1.xpose.msra.mxu0 %v223
    %755 = vmatprep.subr.mxu0 0.0
    %756 = vmatpush1.xpose.msra.mxu0 %v226
    %757 = vmatprep.subr.mxu0 0.0
    %758 = vmatpush1.xpose.msra.mxu0 %v229
    %759 = vmatprep.subr.mxu0 0.0
    %760 = vmatpush1.xpose.msra.mxu0 %v232
    %761 = vmatprep.subr.mxu0 0.0
    %762 = vmatpush1.xpose.msra.mxu0 %v235
    %763 = vmatprep.subr.mxu0 0.0
    %764 = vmatpush1.xpose.msra.mxu0 %v238
    %765 = vmatprep.subr.mxu0 0.0
    %766 = vmatpush1.xpose.msra.mxu0 %v241
    %767 = vmatprep.subr.mxu0 0.0
    %768 = vmatpush1.xpose.msra.mxu0 %v244
    %769 = vmatprep.subr.mxu0 0.0
    %770 = vmatpush1.xpose.msra.mxu0 %v247
    %771 = vmatprep.subr.mxu0 0.0
    %772 = vmatpush1.xpose.msra.mxu0 %v250
    %773 = vmatprep.subr.mxu0 0.0
    %774 = vmatpush1.xpose.msra.mxu0 %v253
    %775 = vmatprep.mubr.f32.mxu0 0.0
    %776 = vmatmul.mubr.f32.gmra.mrb[0].mxu0 %v709
    %v777 = vpop.f32.mrb[0].mxu0
    %v778 = vadd.f32 0.0, %v777
    %v779 = vpop.f32.mrb[0].mxu0
    %v780 = vadd.f32 0.0, %v779
    %781 = vdwg.mxu0
    %v782 = vmul.f32 %v631, %v778
    %v783 = vmul.f32 %v632, %v780
    %v784 = vpack.c.bf16 %v782, %v782
    %v785 = vpack.c.bf16 %v783, %v783
    %v786 = vmul.f32 %v707, %v707
    %v787 = vmul.f32 %v786, %v702
    %vm788 = vcmask 62464
    %v789 = vsel %vm788, %v787, 0.0
    %790 = vadd.xlane.f32.xlu0 %v789
    %v791 = vpop.xlane.xlu0 %790
    %v792 = vpack.c.bf16 %v454, %v450
    %v793 = vpack.c.bf16 %v456, %v452
    %v794 = vpack.c.bf16 %v464, %v460
    %v795 = vpack.c.bf16 %v466, %v462
    %v796 = vpack.c.bf16 %v474, %v470
    %v797 = vpack.c.bf16 %v476, %v472
    %v798 = vpack.c.bf16 %v484, %v480
    %v799 = vpack.c.bf16 %v486, %v482
    %v800 = vpack.c.bf16 %v494, %v490
    %v801 = vpack.c.bf16 %v496, %v492
    %v802 = vpack.c.bf16 %v504, %v500
    %v803 = vpack.c.bf16 %v506, %v502
    %v804 = vpack.c.bf16 %v514, %v510
    %v805 = vpack.c.bf16 %v516, %v512
    %v806 = vpack.c.bf16 %v524, %v520
    %v807 = vpack.c.bf16 %v526, %v522
    %808 = vmatprep.subr.bf16.mxu0 %v793
    %809 = vmatpush1.bf16.xpose.msra.mxu0 %v792
    %810 = vmatprep.subr.bf16.mxu0 %v795
    %811 = vmatpush1.bf16.xpose.msra.mxu0 %v794
    %812 = vmatprep.subr.bf16.mxu0 %v797
    %813 = vmatpush1.bf16.xpose.msra.mxu0 %v796
    %814 = vmatprep.subr.bf16.mxu0 %v799
    %815 = vmatpush1.bf16.xpose.msra.mxu0 %v798
    %816 = vmatprep.subr.bf16.mxu0 %v801
    %817 = vmatpush1.bf16.xpose.msra.mxu0 %v800
    %818 = vmatprep.subr.bf16.mxu0 %v803
    %819 = vmatpush1.bf16.xpose.msra.mxu0 %v802
    %820 = vmatprep.subr.bf16.mxu0 %v805
    %821 = vmatpush1.bf16.xpose.msra.mxu0 %v804
    %822 = vmatprep.subr.bf16.mxu0 %v807
    %823 = vmatpush1.bf16.xpose.msra.mxu0 %v806
    %824 = vmatprep.subr.bf16.mxu0 0
    %825 = vmatpush1.bf16.xpose.msra.mxu0 0
    %826 = vmatprep.subr.bf16.mxu0 0
    %827 = vmatpush1.bf16.xpose.msra.mxu0 0
    %828 = vmatprep.subr.bf16.mxu0 0
    %829 = vmatpush1.bf16.xpose.msra.mxu0 0
    %830 = vmatprep.subr.bf16.mxu0 0
    %831 = vmatpush1.bf16.xpose.msra.mxu0 0
    %832 = vmatprep.subr.bf16.mxu0 0
    %833 = vmatpush1.bf16.xpose.msra.mxu0 0
    %834 = vmatprep.subr.bf16.mxu0 0
    %835 = vmatpush1.bf16.xpose.msra.mxu0 0
    %836 = vmatprep.subr.bf16.mxu0 0
    %837 = vmatpush1.bf16.xpose.msra.mxu0 0
    %838 = vmatprep.subr.bf16.mxu0 0
    %839 = vmatpush1.bf16.xpose.msra.mxu0 0
    %840 = vmatprep.mubr.bf16.mxu0 %v785
    %841 = vmatmul.mubr.bf16.gmra.mrb[0].mxu0 %v784
    %v842 = vpop.f32.mrb[0].mxu0
    %v843 = vadd.f32 0.0, %v842
    %v844 = vpop.f32.mrb[0].mxu0
    %v845 = vpop.f32.mrb[0].mxu0
    %v846 = vpop.f32.mrb[0].mxu0
    %847 = vdwg.mxu0
    %v848 = vmul.f32 %v843, 2.0
    %v849 = vmul.f32 %v848, %v365
    %v850 = vsub.f32 %v849, %v791
    %v851 = vmul.f32 %v365, %v365
    %v852 = vmul.f32 %v627, %v851
    %v853 = vlaneseq
    %v854 = vshrl.u32 %v853, 7
    %v855 = vsub.s32 0, %v854
    %v856 = vrot.slane %v852, %v855
    %v857 = vsub.f32 %v850, %v856
    %858 = vst [vmem:[#allocation2] sm:$0x3f] %v857
    // Predicated region
    $region22: #{sur_model_forward.1} parent=1 // pred_check
      _
    $region23: #{sur_model_forward.1} parent=1 // pred_check_branch
      %860 = sbr.rel (0) target = $region25
    $region24: #{sur_model_forward.1} parent=1 // pred_region
      %s862 = ssub.s32 128, 128
      %863 = vsyncadd [#allocation3], %s862
      %s865 = sshll.u32 [#allocation2], 4
      %s866 = int_to_ptr.vmem [resolvable:$true] %s865
      %868 = dma.vmem_to_hbm [thread:$0]  %s866, 128, %s5, [#allocation3]
    $region25: #{sur_model_forward.1} parent=1 // pred_fallthru
      _
    // Predicated region
    $region26: #{sur_model_forward.1} parent=1 // pred_check
      _
    $region27: #{sur_model_forward.1} parent=1 // pred_check_branch
      %870 = sbr.rel (0) target = $region29
    $region28: #{sur_model_forward.1} parent=1 // pred_region
      %871 = dma.done [#allocation3], 128
    $region29: #{sur_model_forward.1} parent=1 // pred_fallthru
      _
    %872 = vsyncpa [#allocation3], 1

</llo_original>
